<compile_context>
chip_gen: v7x
topology: tpu7x:2x2x1
jax: 0.10.0
libtpu: 0.0.40
codegen_flags: <defaults>
</compile_context>

<pallas_src>
import jax
import jax.numpy as jnp
from jax.experimental import pallas as pl
from jax.experimental.pallas import tpu as pltpu

EPS = 1e-5
_MIB = 1024 * 1024


def _round_up(v, m):
    return ((v + m - 1) // m) * m


def _vmem_ceiling_bytes():
    """~80% of per-core VMEM (headroom for Mosaic internal scratch).

    Falls back to a v7x-safe value if the hardware query is unavailable.
    """
    try:
        cap = int(getattr(pltpu.get_tpu_info(), "vmem_capacity_bytes", 0) or 0)
    except Exception:
        cap = 0
    if cap <= 0:
        cap = 64 * _MIB                      # v7x per-core VMEM (conservative)
    return (cap * 4) // 5


def _budget_bytes(tile_b, c_pad, io_bytes, w_bytes, n_param_bufs):
    """Estimated VMEM footprint of one pipelined generation."""
    resident = n_param_bufs * (2 * c_pad * c_pad * w_bytes + 6 * c_pad * 4)
    streams = 2 * (2 * tile_b * c_pad * io_bytes)   # x + out, double-buffered
    temps = 4 * tile_b * c_pad * 4                  # f32 intermediates
    return resident + streams + temps


def _pick_tile_b(batch, c_pad, io_bytes, w_bytes, n_param_bufs, ceiling):
    """Largest batch tile (multiple of 8, <= round_up(batch)) fitting VMEM."""
    if batch < 8:
        return batch                                 # one full (tiny) block
    b_cap = _round_up(batch, 8)
    for cand in (1024, 512, 256, 128, 64, 32, 16, 8):
        if cand > b_cap:
            continue
        if _budget_bytes(cand, c_pad, io_bytes, w_bytes,
                         n_param_bufs) <= (ceiling * 3) // 4:
            return cand
    return 8


def _make_kernel(c_true, c_pad, mm_dtype):
    """Fused (Linear -> LayerNorm -> ReLU) x2 + residual over one batch tile.

    c_true: real feature width (LN divisor).
    c_pad : lane width of the blocks (== c_true on the fast path).
    mm_dtype: dtype fed to the MXU (weights stored in this dtype).
    """
    inv_c = 1.0 / float(c_true)
    needs_mask = c_pad != c_true

    def kernel(x_ref,
               w1_ref, b1_ref, g1_ref, be1_ref,
               w2_ref, b2_ref, g2_ref, be2_ref,
               o_ref):
        # Single tile load, reused for the MXU feed and the residual add.
        x_f32 = x_ref[...].astype(jnp.float32)

        b1 = b1_ref[...]
        g1 = g1_ref[...]
        be1 = be1_ref[...]
        b2 = b2_ref[...]
        g2 = g2_ref[...]
        be2 = be2_ref[...]

        if needs_mask:
            lane = jax.lax.broadcasted_iota(jnp.int32, (1, c_pad), 1)
            mask = (lane < c_true).astype(jnp.float32)       # (1, Cp)
        else:
            mask = None

        def ln_relu(h, gamma, beta):
            # Padded lanes of h are exactly zero by construction (zero-padded
            # x / weights / bias), so sum(h)/C is already the exact mean; only
            # the deviation needs masking for the variance.
            mu = jnp.sum(h, axis=-1, keepdims=True) * inv_c
            diff = h - mu
            dm = diff * mask if mask is not None else diff
            var = jnp.sum(dm * dm, axis=-1, keepdims=True) * inv_c
            hn = diff * jax.lax.rsqrt(var + EPS)
            # gamma/beta are zero in padded lanes -> padded lanes stay 0.
            return jnp.maximum(hn * gamma + beta, 0.0)

        # ---- fc1: Linear (pre-transposed weight) -> LayerNorm -> ReLU ----
        h1 = jnp.dot(x_f32.astype(mm_dtype), w1_ref[...],
                     preferred_element_type=jnp.float32) + b1
        h1 = ln_relu(h1, g1, be1)

        # ---- fc2: Linear -> LayerNorm -> ReLU ----
        h2 = jnp.dot(h1.astype(mm_dtype), w2_ref[...],
                     preferred_element_type=jnp.float32) + b2
        h2 = ln_relu(h2, g2, be2)

        # ---- residual add in f32; padded lanes are 0 + 0 ----
        o_ref[...] = (h2 + x_f32).astype(o_ref.dtype)

    return kernel


def res_fc_block2(x, params, *, matmul_dtype=jnp.bfloat16, tile_b=None):
    """Fused ResFCBlock2 forward.

    x: (..., C).  params: dict with w1,b1,g1,beta1,w2,b2,g2,beta2; weights in
    PyTorch convention (C_out, C_in), transposed here outside the kernel.
    Output dtype == x.dtype (pass bf16 x for bf16 activation I/O; LN math is
    always f32 in-kernel).  matmul_dtype=bf16 is the production default;
    pass jnp.float32 only for parity checks against an f32 reference.
    """
    orig_shape = x.shape
    C = orig_shape[-1]
    x2 = x.reshape(-1, C)
    B = x2.shape[0]

    fast = (C % 128 == 0)
    Cp = C if fast else _round_up(max(C, 128), 128)

    # ---- pre-transpose / pad parameters (one-time XLA ops, not in-kernel) ---
    def prep_w(w):          # (C_out, C_in) -> (C_in, C_out), padded, MXU dtype
        wt = jnp.asarray(w).T.astype(matmul_dtype)
        if Cp != C:
            wt = jnp.pad(wt, ((0, Cp - C), (0, Cp - C)))
        return wt

    def prep_v(v):          # (C,) -> (1, Cp) f32, zero-padded
        v = jnp.asarray(v, jnp.float32).reshape(1, C)
        if Cp != C:
            v = jnp.pad(v, ((0, 0), (0, Cp - C)))
        return v

    w1, w2 = prep_w(params["w1"]), prep_w(params["w2"])
    b1, g1, be1 = prep_v(params["b1"]), prep_v(params["g1"]), prep_v(params["beta1"])
    b2, g2, be2 = prep_v(params["b2"]), prep_v(params["g2"]), prep_v(params["beta2"])

    # Activations: untouched on the fast path; lane-pad C only (never B).
    x_p = x2 if fast else jnp.pad(x2, ((0, 0), (0, Cp - C)))

    io_bytes = jnp.dtype(x.dtype).itemsize
    w_bytes = jnp.dtype(matmul_dtype).itemsize
    ceiling = _vmem_ceiling_bytes()
    kernel = _make_kernel(C, Cp, matmul_dtype)

    def run(single_buffer_params):
        n_bufs = 1 if single_buffer_params else 2

        if tile_b is None:
            tb = _pick_tile_b(B, Cp, io_bytes, w_bytes, n_bufs, ceiling)
            # Keep >= 2 grid steps for big batches so both v7x TensorCores
            # get work (harmless on 1-TC chips: step overhead ~0.35 us).
            if B >= 256 and pl.cdiv(B, tb) < 2:
                tb = _round_up((B + 1) // 2, 8)
        else:
            tb = B if B < 8 else max(8, _round_up(min(tile_b, _round_up(B, 8)), 8))

        grid = (pl.cdiv(B, tb),)
        budget = _budget_bytes(tb, Cp, io_bytes, w_bytes, n_bufs)
        vmem_limit = int(min(ceiling, max(budget + budget // 4, 32 * _MIB)))

        act_spec = pl.BlockSpec((tb, Cp), lambda i: (i, 0))
        if single_buffer_params:
            # Grid-invariant blocks: one resident copy, no double-buffering.
            w_spec = pl.BlockSpec((Cp, Cp), lambda i: (0, 0),
                                  pipeline_mode=pl.Buffered(1))
            v_spec = pl.BlockSpec((1, Cp), lambda i: (0, 0),
                                  pipeline_mode=pl.Buffered(1))
        else:
            w_spec = pl.BlockSpec((Cp, Cp), lambda i: (0, 0))
            v_spec = pl.BlockSpec((1, Cp), lambda i: (0, 0))

        return pl.pallas_call(
            kernel,
            out_shape=jax.ShapeDtypeStruct((B, Cp), x.dtype),
            grid=grid,
            in_specs=[act_spec,
                      w_spec, v_spec, v_spec, v_spec,
                      w_spec, v_spec, v_spec, v_spec],
            out_specs=act_spec,
            compiler_params=pltpu.CompilerParams(
                dimension_semantics=("parallel",),
                vmem_limit_bytes=vmem_limit),
        )(x_p, w1, b1, g1, be1, w2, b2, g2, be2)

    try:
        out = run(True)
    except Exception:
        # Builds that reject pl.Buffered(1): fall back to default
        # double-buffered (still grid-invariant) parameter blocks.
        out = run(False)

    if not fast:
        out = out[:, :C]
    return out.reshape(orig_shape)


def _reference(x, p):
    def block(h, w, b, g, be):
        h = h @ w.T + b
        mu = jnp.mean(h, axis=-1, keepdims=True)
        var = jnp.mean((h - mu) ** 2, axis=-1, keepdims=True)
        h = (h - mu) / jnp.sqrt(var + EPS) * g + be
        return jnp.maximum(h, 0.0)

    h1 = block(x, p["w1"], p["b1"], p["g1"], p["beta1"])
    h2 = block(h1, p["w2"], p["b2"], p["g2"], p["beta2"])
    return h2 + x


def _make_params(key, C):
    kw1, kb1, kw2, kb2 = jax.random.split(key, 4)
    bound = 1.0 / jnp.sqrt(jnp.float32(C))
    return {
        "w1": jax.random.uniform(kw1, (C, C), jnp.float32, -bound, bound),
        "b1": jax.random.uniform(kb1, (C,), jnp.float32, -bound, bound),
        "g1": jnp.ones((C,), jnp.float32),
        "beta1": jnp.zeros((C,), jnp.float32),
        "w2": jax.random.uniform(kw2, (C, C), jnp.float32, -bound, bound),
        "b2": jax.random.uniform(kb2, (C,), jnp.float32, -bound, bound),
        "g2": jnp.ones((C,), jnp.float32),
        "beta2": jnp.zeros((C,), jnp.float32),
    }


if __name__ == "__main__":
    key = jax.random.PRNGKey(0)
    k1, k2, k3, k4 = jax.random.split(key, 4)

    # --- Case 1: small, non-128-multiple C (lane-padded path). ---------------
    B, C = 8, 32
    x = jax.random.normal(k1, (B, C), dtype=jnp.float32)
    params = _make_params(k2, C)
    ref = _reference(x, params)

    out_f32 = jax.block_until_ready(
        res_fc_block2(x, params, matmul_dtype=jnp.float32))
    assert out_f32.shape == (B, C) and out_f32.dtype == x.dtype
    assert jnp.allclose(out_f32, ref, atol=1e-5, rtol=1e-5), "f32 path mismatch"

    out_bf16 = jax.block_until_ready(res_fc_block2(x, params))  # bf16 MXU default
    assert jnp.allclose(out_bf16, ref, atol=3e-2, rtol=3e-2), "bf16 MXU mismatch"

    # --- Case 2: 128-multiple C (no-pad fast path) with ragged batch tiles. --
    B, C = 20, 128
    x = jax.random.normal(k3, (B, C), dtype=jnp.float32)
    params = _make_params(k4, C)
    ref = _reference(x, params)

    out_fast = jax.block_until_ready(
        res_fc_block2(x, params, matmul_dtype=jnp.float32, tile_b=8))
    assert out_fast.shape == (B, C)
    assert jnp.allclose(out_fast, ref, atol=1e-5, rtol=1e-5), "fast path mismatch"

    # --- Case 3: bf16 activation I/O (memory-bound: halves HBM traffic). -----
    x_bf16 = x.astype(jnp.bfloat16)
    ref_bf16 = _reference(x_bf16.astype(jnp.float32), params)
    out_io = jax.block_until_ready(res_fc_block2(x_bf16, params))
    assert out_io.dtype == jnp.bfloat16 and out_io.shape == (B, C)
    assert jnp.allclose(out_io.astype(jnp.float32), ref_bf16,
                        atol=5e-2, rtol=5e-2), "bf16 I/O mismatch"

    print("KERNEL_OK")
</pallas_src>

<mosaic_0001>
module attributes {stable_mosaic.version = 11 : i64} {
  func.func @kernel(%arg0: i32, %arg1: memref<8x128xf32, #tpu.memory_space<vmem>>, %arg2: memref<128x128xf32, #tpu.memory_space<vmem>>, %arg3: memref<1x128xf32, #tpu.memory_space<vmem>>, %arg4: memref<1x128xf32, #tpu.memory_space<vmem>>, %arg5: memref<1x128xf32, #tpu.memory_space<vmem>>, %arg6: memref<128x128xf32, #tpu.memory_space<vmem>>, %arg7: memref<1x128xf32, #tpu.memory_space<vmem>>, %arg8: memref<1x128xf32, #tpu.memory_space<vmem>>, %arg9: memref<1x128xf32, #tpu.memory_space<vmem>>, %arg10: memref<8x128xf32, #tpu.memory_space<vmem>>) attributes {dimension_semantics = [#tpu.dimension_semantics<parallel>], iteration_bounds = array<i64: 1>, scalar_prefetch = 0 : i64, scratch_operands = 0 : i64, tpu.core_type = #tpu.core_type<tc>, window_params = [{transform_indices = @transform_0, window_bounds = array<i64: 8, 128>}, {pipeline_mode = #tpu.pipeline_mode<synchronous>, transform_indices = @transform_1, window_bounds = array<i64: 128, 128>}, {pipeline_mode = #tpu.pipeline_mode<synchronous>, transform_indices = @transform_2, window_bounds = array<i64: 1, 128>}, {pipeline_mode = #tpu.pipeline_mode<synchronous>, transform_indices = @transform_3, window_bounds = array<i64: 1, 128>}, {pipeline_mode = #tpu.pipeline_mode<synchronous>, transform_indices = @transform_4, window_bounds = array<i64: 1, 128>}, {pipeline_mode = #tpu.pipeline_mode<synchronous>, transform_indices = @transform_5, window_bounds = array<i64: 128, 128>}, {pipeline_mode = #tpu.pipeline_mode<synchronous>, transform_indices = @transform_6, window_bounds = array<i64: 1, 128>}, {pipeline_mode = #tpu.pipeline_mode<synchronous>, transform_indices = @transform_7, window_bounds = array<i64: 1, 128>}, {pipeline_mode = #tpu.pipeline_mode<synchronous>, transform_indices = @transform_8, window_bounds = array<i64: 1, 128>}, {transform_indices = @transform_9, window_bounds = array<i64: 8, 128>}]} {
    %c0 = arith.constant 0 : index
    %c0_0 = arith.constant 0 : index
    %0 = vector.load %arg1[%c0, %c0_0] : memref<8x128xf32, #tpu.memory_space<vmem>>, vector<8x128xf32>
    %c0_1 = arith.constant 0 : index
    %c0_2 = arith.constant 0 : index
    %1 = vector.load %arg3[%c0_1, %c0_2] : memref<1x128xf32, #tpu.memory_space<vmem>>, vector<1x128xf32>
    %c0_3 = arith.constant 0 : index
    %c0_4 = arith.constant 0 : index
    %2 = vector.load %arg4[%c0_3, %c0_4] : memref<1x128xf32, #tpu.memory_space<vmem>>, vector<1x128xf32>
    %c0_5 = arith.constant 0 : index
    %c0_6 = arith.constant 0 : index
    %3 = vector.load %arg5[%c0_5, %c0_6] : memref<1x128xf32, #tpu.memory_space<vmem>>, vector<1x128xf32>
    %c0_7 = arith.constant 0 : index
    %c0_8 = arith.constant 0 : index
    %4 = vector.load %arg7[%c0_7, %c0_8] : memref<1x128xf32, #tpu.memory_space<vmem>>, vector<1x128xf32>
    %c0_9 = arith.constant 0 : index
    %c0_10 = arith.constant 0 : index
    %5 = vector.load %arg8[%c0_9, %c0_10] : memref<1x128xf32, #tpu.memory_space<vmem>>, vector<1x128xf32>
    %c0_11 = arith.constant 0 : index
    %c0_12 = arith.constant 0 : index
    %6 = vector.load %arg9[%c0_11, %c0_12] : memref<1x128xf32, #tpu.memory_space<vmem>>, vector<1x128xf32>
    %7 = tpu.iota {dimensions = array<i32: 1>} : vector<1x128xi32>
    %c32_i32 = arith.constant 32 : i32
    %8 = vector.broadcast %c32_i32 : i32 to vector<1x128xi32>
    %9 = arith.cmpi slt, %7, %8 : vector<1x128xi32>
    %10 = arith.extui %9 : vector<1x128xi1> to vector<1x128xi32>
    %11 = arith.sitofp %10 : vector<1x128xi32> to vector<1x128xf32>
    %c0_13 = arith.constant 0 : index
    %c0_14 = arith.constant 0 : index
    %12 = vector.load %arg2[%c0_13, %c0_14] : memref<128x128xf32, #tpu.memory_space<vmem>>, vector<128x128xf32>
    %cst = arith.constant dense<0.000000e+00> : vector<8x128xf32>
    %13 = tpu.matmul %0, %12, %cst {dimension_numbers = #tpu.dot_dimension_numbers<[1], [0], [0], [1], [0, 0, 1, 1], [], []>} : vector<8x128xf32>, vector<128x128xf32>, vector<8x128xf32> -> vector<8x128xf32>
    %14 = vector.broadcast %1 : vector<1x128xf32> to vector<8x128xf32>
    %15 = arith.addf %13, %14 : vector<8x128xf32>
    %cst_15 = arith.constant dense<0.000000e+00> : vector<8xf32>
    %16 = vector.multi_reduction <add>, %15, %cst_15 [1] : vector<8x128xf32> to vector<8xf32>
    %17 = vector.shape_cast %16 : vector<8xf32> to vector<8x1xf32>
    %cst_16 = arith.constant 3.125000e-02 : f32
    %18 = vector.broadcast %cst_16 : f32 to vector<8x1xf32>
    %19 = arith.mulf %17, %18 : vector<8x1xf32>
    %20 = vector.broadcast %19 : vector<8x1xf32> to vector<8x128xf32>
    %21 = arith.subf %15, %20 : vector<8x128xf32>
    %22 = vector.broadcast %11 : vector<1x128xf32> to vector<8x128xf32>
    %23 = arith.mulf %21, %22 : vector<8x128xf32>
    %24 = arith.mulf %23, %23 : vector<8x128xf32>
    %cst_17 = arith.constant dense<0.000000e+00> : vector<8xf32>
    %25 = vector.multi_reduction <add>, %24, %cst_17 [1] : vector<8x128xf32> to vector<8xf32>
    %26 = vector.shape_cast %25 : vector<8xf32> to vector<8x1xf32>
    %cst_18 = arith.constant 3.125000e-02 : f32
    %27 = vector.broadcast %cst_18 : f32 to vector<8x1xf32>
    %28 = arith.mulf %26, %27 : vector<8x1xf32>
    %cst_19 = arith.constant 9.99999974E-6 : f32
    %29 = vector.broadcast %cst_19 : f32 to vector<8x1xf32>
    %30 = arith.addf %28, %29 : vector<8x1xf32>
    %31 = math.rsqrt %30 : vector<8x1xf32>
    %32 = vector.broadcast %31 : vector<8x1xf32> to vector<8x128xf32>
    %33 = arith.mulf %21, %32 : vector<8x128xf32>
    %34 = vector.broadcast %2 : vector<1x128xf32> to vector<8x128xf32>
    %35 = arith.mulf %33, %34 : vector<8x128xf32>
    %36 = vector.broadcast %3 : vector<1x128xf32> to vector<8x128xf32>
    %37 = arith.addf %35, %36 : vector<8x128xf32>
    %cst_20 = arith.constant 0.000000e+00 : f32
    %38 = vector.broadcast %cst_20 : f32 to vector<8x128xf32>
    %39 = arith.maximumf %37, %38 : vector<8x128xf32>
    %c0_21 = arith.constant 0 : index
    %c0_22 = arith.constant 0 : index
    %40 = vector.load %arg6[%c0_21, %c0_22] : memref<128x128xf32, #tpu.memory_space<vmem>>, vector<128x128xf32>
    %cst_23 = arith.constant dense<0.000000e+00> : vector<8x128xf32>
    %41 = tpu.matmul %39, %40, %cst_23 {dimension_numbers = #tpu.dot_dimension_numbers<[1], [0], [0], [1], [0, 0, 1, 1], [], []>} : vector<8x128xf32>, vector<128x128xf32>, vector<8x128xf32> -> vector<8x128xf32>
    %42 = vector.broadcast %4 : vector<1x128xf32> to vector<8x128xf32>
    %43 = arith.addf %41, %42 : vector<8x128xf32>
    %cst_24 = arith.constant dense<0.000000e+00> : vector<8xf32>
    %44 = vector.multi_reduction <add>, %43, %cst_24 [1] : vector<8x128xf32> to vector<8xf32>
    %45 = vector.shape_cast %44 : vector<8xf32> to vector<8x1xf32>
    %cst_25 = arith.constant 3.125000e-02 : f32
    %46 = vector.broadcast %cst_25 : f32 to vector<8x1xf32>
    %47 = arith.mulf %45, %46 : vector<8x1xf32>
    %48 = vector.broadcast %47 : vector<8x1xf32> to vector<8x128xf32>
    %49 = arith.subf %43, %48 : vector<8x128xf32>
    %50 = vector.broadcast %11 : vector<1x128xf32> to vector<8x128xf32>
    %51 = arith.mulf %49, %50 : vector<8x128xf32>
    %52 = arith.mulf %51, %51 : vector<8x128xf32>
    %cst_26 = arith.constant dense<0.000000e+00> : vector<8xf32>
    %53 = vector.multi_reduction <add>, %52, %cst_26 [1] : vector<8x128xf32> to vector<8xf32>
    %54 = vector.shape_cast %53 : vector<8xf32> to vector<8x1xf32>
    %cst_27 = arith.constant 3.125000e-02 : f32
    %55 = vector.broadcast %cst_27 : f32 to vector<8x1xf32>
    %56 = arith.mulf %54, %55 : vector<8x1xf32>
    %cst_28 = arith.constant 9.99999974E-6 : f32
    %57 = vector.broadcast %cst_28 : f32 to vector<8x1xf32>
    %58 = arith.addf %56, %57 : vector<8x1xf32>
    %59 = math.rsqrt %58 : vector<8x1xf32>
    %60 = vector.broadcast %59 : vector<8x1xf32> to vector<8x128xf32>
    %61 = arith.mulf %49, %60 : vector<8x128xf32>
    %62 = vector.broadcast %5 : vector<1x128xf32> to vector<8x128xf32>
    %63 = arith.mulf %61, %62 : vector<8x128xf32>
    %64 = vector.broadcast %6 : vector<1x128xf32> to vector<8x128xf32>
    %65 = arith.addf %63, %64 : vector<8x128xf32>
    %cst_29 = arith.constant 0.000000e+00 : f32
    %66 = vector.broadcast %cst_29 : f32 to vector<8x128xf32>
    %67 = arith.maximumf %65, %66 : vector<8x128xf32>
    %68 = arith.addf %67, %0 : vector<8x128xf32>
    %c0_30 = arith.constant 0 : index
    %c0_31 = arith.constant 0 : index
    %69 = vector.load %arg10[%c0_30, %c0_31] : memref<8x128xf32, #tpu.memory_space<vmem>>, vector<8x128xf32>
    tpu.vector_store %arg10[%c0_30, %c0_31], %68 {strides = array<i32>} : memref<8x128xf32, #tpu.memory_space<vmem>>, vector<8x128xf32>,
    return
  }
  func.func @transform_0(%arg0: i32) -> (i32, i32) {
    %c0_i32 = arith.constant 0 : i32
    %c0_i32_0 = arith.constant 0 : i32
    return %arg0, %c0_i32 : i32, i32
  }
  func.func @transform_1(%arg0: i32) -> (i32, i32) {
    %c0_i32 = arith.constant 0 : i32
    %c0_i32_0 = arith.constant 0 : i32
    %c0_i32_1 = arith.constant 0 : i32
    return %c0_i32, %c0_i32_0 : i32, i32
  }
  func.func @transform_2(%arg0: i32) -> (i32, i32) {
    %c0_i32 = arith.constant 0 : i32
    %c0_i32_0 = arith.constant 0 : i32
    %c0_i32_1 = arith.constant 0 : i32
    return %c0_i32, %c0_i32_0 : i32, i32
  }
  func.func @transform_3(%arg0: i32) -> (i32, i32) {
    %c0_i32 = arith.constant 0 : i32
    %c0_i32_0 = arith.constant 0 : i32
    %c0_i32_1 = arith.constant 0 : i32
    return %c0_i32, %c0_i32_0 : i32, i32
  }
  func.func @transform_4(%arg0: i32) -> (i32, i32) {
    %c0_i32 = arith.constant 0 : i32
    %c0_i32_0 = arith.constant 0 : i32
    %c0_i32_1 = arith.constant 0 : i32
    return %c0_i32, %c0_i32_0 : i32, i32
  }
  func.func @transform_5(%arg0: i32) -> (i32, i32) {
    %c0_i32 = arith.constant 0 : i32
    %c0_i32_0 = arith.constant 0 : i32
    %c0_i32_1 = arith.constant 0 : i32
    return %c0_i32, %c0_i32_0 : i32, i32
  }
  func.func @transform_6(%arg0: i32) -> (i32, i32) {
    %c0_i32 = arith.constant 0 : i32
    %c0_i32_0 = arith.constant 0 : i32
    %c0_i32_1 = arith.constant 0 : i32
    return %c0_i32, %c0_i32_0 : i32, i32
  }
  func.func @transform_7(%arg0: i32) -> (i32, i32) {
    %c0_i32 = arith.constant 0 : i32
    %c0_i32_0 = arith.constant 0 : i32
    %c0_i32_1 = arith.constant 0 : i32
    return %c0_i32, %c0_i32_0 : i32, i32
  }
  func.func @transform_8(%arg0: i32) -> (i32, i32) {
    %c0_i32 = arith.constant 0 : i32
    %c0_i32_0 = arith.constant 0 : i32
    %c0_i32_1 = arith.constant 0 : i32
    return %c0_i32, %c0_i32_0 : i32, i32
  }
  func.func @transform_9(%arg0: i32) -> (i32, i32) {
    %c0_i32 = arith.constant 0 : i32
    %c0_i32_0 = arith.constant 0 : i32
    return %arg0, %c0_i32 : i32, i32
  }
}

module attributes {stable_mosaic.version = 11 : i64} {
  func.func @kernel(%arg0: i32, %arg1: memref<8x128xf32, #tpu.memory_space<vmem>>, %arg2: memref<128x128xf32, #tpu.memory_space<vmem>>, %arg3: memref<1x128xf32, #tpu.memory_space<vmem>>, %arg4: memref<1x128xf32, #tpu.memory_space<vmem>>, %arg5: memref<1x128xf32, #tpu.memory_space<vmem>>, %arg6: memref<128x128xf32, #tpu.memory_space<vmem>>, %arg7: memref<1x128xf32, #tpu.memory_space<vmem>>, %arg8: memref<1x128xf32, #tpu.memory_space<vmem>>, %arg9: memref<1x128xf32, #tpu.memory_space<vmem>>, %arg10: memref<8x128xf32, #tpu.memory_space<vmem>>) attributes {dimension_semantics = [#tpu.dimension_semantics<parallel>], iteration_bounds = array<i64: 1>, scalar_prefetch = 0 : i64, scratch_operands = 0 : i64, tpu.core_type = #tpu.core_type<tc>, window_params = [{transform_indices = @transform_0, window_bounds = array<i64: 8, 128>}, {pipeline_mode = #tpu.pipeline_mode<synchronous>, transform_indices = @transform_1, window_bounds = array<i64: 128, 128>}, {pipeline_mode = #tpu.pipeline_mode<synchronous>, transform_indices = @transform_2, window_bounds = array<i64: 1, 128>}, {pipeline_mode = #tpu.pipeline_mode<synchronous>, transform_indices = @transform_3, window_bounds = array<i64: 1, 128>}, {pipeline_mode = #tpu.pipeline_mode<synchronous>, transform_indices = @transform_4, window_bounds = array<i64: 1, 128>}, {pipeline_mode = #tpu.pipeline_mode<synchronous>, transform_indices = @transform_5, window_bounds = array<i64: 128, 128>}, {pipeline_mode = #tpu.pipeline_mode<synchronous>, transform_indices = @transform_6, window_bounds = array<i64: 1, 128>}, {pipeline_mode = #tpu.pipeline_mode<synchronous>, transform_indices = @transform_7, window_bounds = array<i64: 1, 128>}, {pipeline_mode = #tpu.pipeline_mode<synchronous>, transform_indices = @transform_8, window_bounds = array<i64: 1, 128>}, {transform_indices = @transform_9, window_bounds = array<i64: 8, 128>}]} {
    %c0 = arith.constant 0 : index
    %c0_0 = arith.constant 0 : index
    %0 = vector.load %arg1[%c0, %c0_0] : memref<8x128xf32, #tpu.memory_space<vmem>>, vector<8x128xf32>
    %c0_1 = arith.constant 0 : index
    %c0_2 = arith.constant 0 : index
    %1 = vector.load %arg3[%c0_1, %c0_2] : memref<1x128xf32, #tpu.memory_space<vmem>>, vector<1x128xf32>
    %c0_3 = arith.constant 0 : index
    %c0_4 = arith.constant 0 : index
    %2 = vector.load %arg4[%c0_3, %c0_4] : memref<1x128xf32, #tpu.memory_space<vmem>>, vector<1x128xf32>
    %c0_5 = arith.constant 0 : index
    %c0_6 = arith.constant 0 : index
    %3 = vector.load %arg5[%c0_5, %c0_6] : memref<1x128xf32, #tpu.memory_space<vmem>>, vector<1x128xf32>
    %c0_7 = arith.constant 0 : index
    %c0_8 = arith.constant 0 : index
    %4 = vector.load %arg7[%c0_7, %c0_8] : memref<1x128xf32, #tpu.memory_space<vmem>>, vector<1x128xf32>
    %c0_9 = arith.constant 0 : index
    %c0_10 = arith.constant 0 : index
    %5 = vector.load %arg8[%c0_9, %c0_10] : memref<1x128xf32, #tpu.memory_space<vmem>>, vector<1x128xf32>
    %c0_11 = arith.constant 0 : index
    %c0_12 = arith.constant 0 : index
    %6 = vector.load %arg9[%c0_11, %c0_12] : memref<1x128xf32, #tpu.memory_space<vmem>>, vector<1x128xf32>
    %7 = tpu.iota {dimensions = array<i32: 1>} : vector<1x128xi32>
    %c32_i32 = arith.constant 32 : i32
    %8 = vector.broadcast %c32_i32 : i32 to vector<1x128xi32>
    %9 = arith.cmpi slt, %7, %8 : vector<1x128xi32>
    %10 = arith.extui %9 : vector<1x128xi1> to vector<1x128xi32>
    %11 = arith.sitofp %10 : vector<1x128xi32> to vector<1x128xf32>
    %c0_13 = arith.constant 0 : index
    %c0_14 = arith.constant 0 : index
    %12 = vector.load %arg2[%c0_13, %c0_14] : memref<128x128xf32, #tpu.memory_space<vmem>>, vector<128x128xf32>
    %cst = arith.constant dense<0.000000e+00> : vector<8x128xf32>
    %13 = tpu.matmul %0, %12, %cst {dimension_numbers = #tpu.dot_dimension_numbers<[1], [0], [0], [1], [0, 0, 1, 1], [], []>} : vector<8x128xf32>, vector<128x128xf32>, vector<8x128xf32> -> vector<8x128xf32>
    %14 = vector.broadcast %1 : vector<1x128xf32> to vector<8x128xf32>
    %15 = arith.addf %13, %14 : vector<8x128xf32>
    %cst_15 = arith.constant dense<0.000000e+00> : vector<8xf32>
    %16 = vector.multi_reduction <add>, %15, %cst_15 [1] : vector<8x128xf32> to vector<8xf32>
    %17 = vector.shape_cast %16 : vector<8xf32> to vector<8x1xf32>
    %cst_16 = arith.constant 3.125000e-02 : f32
    %18 = vector.broadcast %cst_16 : f32 to vector<8x1xf32>
    %19 = arith.mulf %17, %18 : vector<8x1xf32>
    %20 = vector.broadcast %19 : vector<8x1xf32> to vector<8x128xf32>
    %21 = arith.subf %15, %20 : vector<8x128xf32>
    %22 = vector.broadcast %11 : vector<1x128xf32> to vector<8x128xf32>
    %23 = arith.mulf %21, %22 : vector<8x128xf32>
    %24 = arith.mulf %23, %23 : vector<8x128xf32>
    %cst_17 = arith.constant dense<0.000000e+00> : vector<8xf32>
    %25 = vector.multi_reduction <add>, %24, %cst_17 [1] : vector<8x128xf32> to vector<8xf32>
    %26 = vector.shape_cast %25 : vector<8xf32> to vector<8x1xf32>
    %cst_18 = arith.constant 3.125000e-02 : f32
    %27 = vector.broadcast %cst_18 : f32 to vector<8x1xf32>
    %28 = arith.mulf %26, %27 : vector<8x1xf32>
    %cst_19 = arith.constant 9.99999974E-6 : f32
    %29 = vector.broadcast %cst_19 : f32 to vector<8x1xf32>
    %30 = arith.addf %28, %29 : vector<8x1xf32>
    %31 = math.rsqrt %30 : vector<8x1xf32>
    %32 = vector.broadcast %31 : vector<8x1xf32> to vector<8x128xf32>
    %33 = arith.mulf %21, %32 : vector<8x128xf32>
    %34 = vector.broadcast %2 : vector<1x128xf32> to vector<8x128xf32>
    %35 = arith.mulf %33, %34 : vector<8x128xf32>
    %36 = vector.broadcast %3 : vector<1x128xf32> to vector<8x128xf32>
    %37 = arith.addf %35, %36 : vector<8x128xf32>
    %cst_20 = arith.constant 0.000000e+00 : f32
    %38 = vector.broadcast %cst_20 : f32 to vector<8x128xf32>
    %39 = arith.maximumf %37, %38 : vector<8x128xf32>
    %c0_21 = arith.constant 0 : index
    %c0_22 = arith.constant 0 : index
    %40 = vector.load %arg6[%c0_21, %c0_22] : memref<128x128xf32, #tpu.memory_space<vmem>>, vector<128x128xf32>
    %cst_23 = arith.constant dense<0.000000e+00> : vector<8x128xf32>
    %41 = tpu.matmul %39, %40, %cst_23 {dimension_numbers = #tpu.dot_dimension_numbers<[1], [0], [0], [1], [0, 0, 1, 1], [], []>} : vector<8x128xf32>, vector<128x128xf32>, vector<8x128xf32> -> vector<8x128xf32>
    %42 = vector.broadcast %4 : vector<1x128xf32> to vector<8x128xf32>
    %43 = arith.addf %41, %42 : vector<8x128xf32>
    %cst_24 = arith.constant dense<0.000000e+00> : vector<8xf32>
    %44 = vector.multi_reduction <add>, %43, %cst_24 [1] : vector<8x128xf32> to vector<8xf32>
    %45 = vector.shape_cast %44 : vector<8xf32> to vector<8x1xf32>
    %cst_25 = arith.constant 3.125000e-02 : f32
    %46 = vector.broadcast %cst_25 : f32 to vector<8x1xf32>
    %47 = arith.mulf %45, %46 : vector<8x1xf32>
    %48 = vector.broadcast %47 : vector<8x1xf32> to vector<8x128xf32>
    %49 = arith.subf %43, %48 : vector<8x128xf32>
    %50 = vector.broadcast %11 : vector<1x128xf32> to vector<8x128xf32>
    %51 = arith.mulf %49, %50 : vector<8x128xf32>
    %52 = arith.mulf %51, %51 : vector<8x128xf32>
    %cst_26 = arith.constant dense<0.000000e+00> : vector<8xf32>
    %53 = vector.multi_reduction <add>, %52, %cst_26 [1] : vector<8x128xf32> to vector<8xf32>
    %54 = vector.shape_cast %53 : vector<8xf32> to vector<8x1xf32>
    %cst_27 = arith.constant 3.125000e-02 : f32
    %55 = vector.broadcast %cst_27 : f32 to vector<8x1xf32>
    %56 = arith.mulf %54, %55 : vector<8x1xf32>
    %cst_28 = arith.constant 9.99999974E-6 : f32
    %57 = vector.broadcast %cst_28 : f32 to vector<8x1xf32>
    %58 = arith.addf %56, %57 : vector<8x1xf32>
    %59 = math.rsqrt %58 : vector<8x1xf32>
    %60 = vector.broadcast %59 : vector<8x1xf32> to vector<8x128xf32>
    %61 = arith.mulf %49, %60 : vector<8x128xf32>
    %62 = vector.broadcast %5 : vector<1x128xf32> to vector<8x128xf32>
    %63 = arith.mulf %61, %62 : vector<8x128xf32>
    %64 = vector.broadcast %6 : vector<1x128xf32> to vector<8x128xf32>
    %65 = arith.addf %63, %64 : vector<8x128xf32>
    %cst_29 = arith.constant 0.000000e+00 : f32
    %66 = vector.broadcast %cst_29 : f32 to vector<8x128xf32>
    %67 = arith.maximumf %65, %66 : vector<8x128xf32>
    %68 = arith.addf %67, %0 : vector<8x128xf32>
    %c0_30 = arith.constant 0 : index
    %c0_31 = arith.constant 0 : index
    %69 = vector.load %arg10[%c0_30, %c0_31] : memref<8x128xf32, #tpu.memory_space<vmem>>, vector<8x128xf32>
    tpu.vector_store %arg10[%c0_30, %c0_31], %68 {strides = array<i32>} : memref<8x128xf32, #tpu.memory_space<vmem>>, vector<8x128xf32>,
    return
  }
  func.func @transform_0(%arg0: i32) -> (i32, i32) {
    %c0_i32 = arith.constant 0 : i32
    %c0_i32_0 = arith.constant 0 : i32
    return %arg0, %c0_i32 : i32, i32
  }
  func.func @transform_1(%arg0: i32) -> (i32, i32) {
    %c0_i32 = arith.constant 0 : i32
    %c0_i32_0 = arith.constant 0 : i32
    %c0_i32_1 = arith.constant 0 : i32
    return %c0_i32, %c0_i32_0 : i32, i32
  }
  func.func @transform_2(%arg0: i32) -> (i32, i32) {
    %c0_i32 = arith.constant 0 : i32
    %c0_i32_0 = arith.constant 0 : i32
    %c0_i32_1 = arith.constant 0 : i32
    return %c0_i32, %c0_i32_0 : i32, i32
  }
  func.func @transform_3(%arg0: i32) -> (i32, i32) {
    %c0_i32 = arith.constant 0 : i32
    %c0_i32_0 = arith.constant 0 : i32
    %c0_i32_1 = arith.constant 0 : i32
    return %c0_i32, %c0_i32_0 : i32, i32
  }
  func.func @transform_4(%arg0: i32) -> (i32, i32) {
    %c0_i32 = arith.constant 0 : i32
    %c0_i32_0 = arith.constant 0 : i32
    %c0_i32_1 = arith.constant 0 : i32
    return %c0_i32, %c0_i32_0 : i32, i32
  }
  func.func @transform_5(%arg0: i32) -> (i32, i32) {
    %c0_i32 = arith.constant 0 : i32
    %c0_i32_0 = arith.constant 0 : i32
    %c0_i32_1 = arith.constant 0 : i32
    return %c0_i32, %c0_i32_0 : i32, i32
  }
  func.func @transform_6(%arg0: i32) -> (i32, i32) {
    %c0_i32 = arith.constant 0 : i32
    %c0_i32_0 = arith.constant 0 : i32
    %c0_i32_1 = arith.constant 0 : i32
    return %c0_i32, %c0_i32_0 : i32, i32
  }
  func.func @transform_7(%arg0: i32) -> (i32, i32) {
    %c0_i32 = arith.constant 0 : i32
    %c0_i32_0 = arith.constant 0 : i32
    %c0_i32_1 = arith.constant 0 : i32
    return %c0_i32, %c0_i32_0 : i32, i32
  }
  func.func @transform_8(%arg0: i32) -> (i32, i32) {
    %c0_i32 = arith.constant 0 : i32
    %c0_i32_0 = arith.constant 0 : i32
    %c0_i32_1 = arith.constant 0 : i32
    return %c0_i32, %c0_i32_0 : i32, i32
  }
  func.func @transform_9(%arg0: i32) -> (i32, i32) {
    %c0_i32 = arith.constant 0 : i32
    %c0_i32_0 = arith.constant 0 : i32
    return %arg0, %c0_i32 : i32, i32
  }
}

</mosaic_0001>

<llo_original>
// kernel: tpu_custom_call.1
$region0: #{tpu_custom_call.1}
  #allocation0 [shape = 'u32[]', space=smem, size = 0x4, offset = 0x4, fixed_abs, tag = 'smem constant byte address 0x4 - core index']
  #allocation1 [shape = 'u32[144,128]{1,0:T(1,128)}', space=vmem, size = 0x12000, scoped, tag = 'internal scratch']
  %s0 = inlined_call_operand.hbm [shape: f32[8,128], index: 0, kind: input, shape index: {}]
  %s1 = inlined_call_operand.hbm [shape: f32[128,128], index: 1, kind: input, shape index: {}]
  %s2 = inlined_call_operand.vmem [shape: f32[1,128], index: 2, kind: input, shape index: {}]
  %s3 = inlined_call_operand.vmem [shape: f32[1,128], index: 3, kind: input, shape index: {}]
  %s4 = inlined_call_operand.vmem [shape: f32[1,128], index: 4, kind: input, shape index: {}]
  %s5 = inlined_call_operand.hbm [shape: f32[128,128], index: 5, kind: input, shape index: {}]
  %s6 = inlined_call_operand.vmem [shape: f32[1,128], index: 6, kind: input, shape index: {}]
  %s7 = inlined_call_operand.vmem [shape: f32[1,128], index: 7, kind: input, shape index: {}]
  %s8 = inlined_call_operand.vmem [shape: f32[1,128], index: 8, kind: input, shape index: {}]
  %s9 = inlined_call_operand.hbm [shape: f32[8,128], index: 9, kind: output, shape index: {}]
  %s10 = sld [smem:[#allocation0]]
  $region58: #{tpu_custom_call.1} parent=0
    _
  %s12 = ssub.s32 1, %s10
  %s13 = scalar_select 0, %s12, %s10
  $region1: #{tpu_custom_call.1} parent=0
    #allocation2 [shape = 'u8[4096]{0}', space=vmem, size = 0x1000, scoped, tag = 'input window, operand 0, single buffered']
    #allocation3 [shape = 's32[1]{0}', space=sflag, size = 0x4, scoped, tag = 'scoped memory for tpu_custom_call.1']
    #allocation4 [shape = 's32[1]{0}', space=sflag, size = 0x4, scoped, tag = 'scoped memory for tpu_custom_call.1']
    #allocation5 [shape = 'u8[65536]{0}', space=vmem, size = 0x10000, scoped, tag = 'input window, operand 1, single buffered']
    #allocation6 [shape = 's32[1]{0}', space=sflag, size = 0x4, scoped, tag = 'scoped memory for tpu_custom_call.1']
    #allocation7 [shape = 'u8[65536]{0}', space=vmem, size = 0x10000, scoped, tag = 'input window, operand 5, single buffered']
    #allocation8 [shape = 'u8[4096]{0}', space=vmem, size = 0x1000, scoped, tag = 'output window, operand 0, single buffered']
    %14 = vsyncpa [#allocation3], 0
    %15 = vsyncpa [#allocation6], 0
    %16 = vsyncpa [#allocation4], 0
    // Predicated region
    $region2: #{tpu_custom_call.1} parent=1 // pred_check
      _
    $region3: #{tpu_custom_call.1} parent=1 // pred_check_branch
      %18 = sbr.rel (0) target = $region5
    $region4: #{tpu_custom_call.1} parent=1 // pred_region
      %s20 = ssub.s32 128, 128
      %21 = vsyncadd [#allocation3], %s20
      %s23 = sshll.u32 [#allocation2], 4
      %s24 = int_to_ptr.vmem [resolvable:$true] %s23
      %26 = dma.hbm_to_vmem [thread:$0]  %s0, 128, %s24, [#allocation3]
    $region5: #{tpu_custom_call.1} parent=1 // pred_fallthru
      _
    // Predicated region
    $region6: #{tpu_custom_call.1} parent=1 // pred_check
      _
    $region7: #{tpu_custom_call.1} parent=1 // pred_check_branch
      %28 = sbr.rel (0) target = $region9
    $region8: #{tpu_custom_call.1} parent=1 // pred_region
      %s30 = ssub.s32 2048, 2048
      %31 = vsyncadd [#allocation6], %s30
      %s32 = sshll.u32 [#allocation5], 4
      %s33 = int_to_ptr.vmem [resolvable:$true] %s32
      %38 = dma.hbm_to_vmem [thread:$0]  %s1, 2048, %s33, [#allocation6], 128, 128, 8
    $region9: #{tpu_custom_call.1} parent=1 // pred_fallthru
      _
    // Predicated region
    $region10: #{tpu_custom_call.1} parent=1 // pred_check
      _
    $region11: #{tpu_custom_call.1} parent=1 // pred_check_branch
      %40 = sbr.rel (0) target = $region13
    $region12: #{tpu_custom_call.1} parent=1 // pred_region
      _
    $region13: #{tpu_custom_call.1} parent=1 // pred_fallthru
      _
    // Predicated region
    $region14: #{tpu_custom_call.1} parent=1 // pred_check
      _
    $region15: #{tpu_custom_call.1} parent=1 // pred_check_branch
      %42 = sbr.rel (0) target = $region17
    $region16: #{tpu_custom_call.1} parent=1 // pred_region
      _
    $region17: #{tpu_custom_call.1} parent=1 // pred_fallthru
      _
    // Predicated region
    $region18: #{tpu_custom_call.1} parent=1 // pred_check
      _
    $region19: #{tpu_custom_call.1} parent=1 // pred_check_branch
      %44 = sbr.rel (0) target = $region21
    $region20: #{tpu_custom_call.1} parent=1 // pred_region
      _
    $region21: #{tpu_custom_call.1} parent=1 // pred_fallthru
      _
    // Predicated region
    $region22: #{tpu_custom_call.1} parent=1 // pred_check
      _
    $region23: #{tpu_custom_call.1} parent=1 // pred_check_branch
      %46 = sbr.rel (0) target = $region25
    $region24: #{tpu_custom_call.1} parent=1 // pred_region
      %s48 = ssub.s32 2048, 2048
      %49 = vsyncadd [#allocation6], %s48
      %s50 = sshll.u32 [#allocation7], 4
      %s51 = int_to_ptr.vmem [resolvable:$true] %s50
      %56 = dma.hbm_to_vmem [thread:$0]  %s5, 2048, %s51, [#allocation6], 128, 128, 8
    $region25: #{tpu_custom_call.1} parent=1 // pred_fallthru
      _
    // Predicated region
    $region26: #{tpu_custom_call.1} parent=1 // pred_check
      _
    $region27: #{tpu_custom_call.1} parent=1 // pred_check_branch
      %58 = sbr.rel (0) target = $region29
    $region28: #{tpu_custom_call.1} parent=1 // pred_region
      _
    $region29: #{tpu_custom_call.1} parent=1 // pred_fallthru
      _
    // Predicated region
    $region30: #{tpu_custom_call.1} parent=1 // pred_check
      _
    $region31: #{tpu_custom_call.1} parent=1 // pred_check_branch
      %60 = sbr.rel (0) target = $region33
    $region32: #{tpu_custom_call.1} parent=1 // pred_region
      _
    $region33: #{tpu_custom_call.1} parent=1 // pred_fallthru
      _
    // Predicated region
    $region34: #{tpu_custom_call.1} parent=1 // pred_check
      _
    $region35: #{tpu_custom_call.1} parent=1 // pred_check_branch
      %62 = sbr.rel (0) target = $region37
    $region36: #{tpu_custom_call.1} parent=1 // pred_region
      _
    $region37: #{tpu_custom_call.1} parent=1 // pred_fallthru
      _
    // Predicated region
    $region38: #{tpu_custom_call.1} parent=1 // pred_check
      _
    $region39: #{tpu_custom_call.1} parent=1 // pred_check_branch
      %64 = sbr.rel (0) target = $region41
    $region40: #{tpu_custom_call.1} parent=1 // pred_region
      %65 = dma.done [#allocation3], 128
    $region41: #{tpu_custom_call.1} parent=1 // pred_fallthru
      _
    // Predicated region
    $region42: #{tpu_custom_call.1} parent=1 // pred_check
      _
    $region43: #{tpu_custom_call.1} parent=1 // pred_check_branch
      %67 = sbr.rel (0) target = $region45
    $region44: #{tpu_custom_call.1} parent=1 // pred_region
      %68 = dma.done [#allocation6], 2048
    $region45: #{tpu_custom_call.1} parent=1 // pred_fallthru
      _
    // Predicated region
    $region46: #{tpu_custom_call.1} parent=1 // pred_check
      _
    $region47: #{tpu_custom_call.1} parent=1 // pred_check_branch
      %70 = sbr.rel (0) target = $region49
    $region48: #{tpu_custom_call.1} parent=1 // pred_region
      %71 = dma.done [#allocation6], 2048
    $region49: #{tpu_custom_call.1} parent=1 // pred_fallthru
      _
    %v72 = vld [vmem:[#allocation2] sm:$0xff]
    %v73 = vld [vmem:[%s2] sm:$0x1]
    %v74 = vld [vmem:[%s3] sm:$0x1]
    %v75 = vld [vmem:[%s4] sm:$0x1]
    %v76 = vld [vmem:[%s6] sm:$0x1]
    %v77 = vld [vmem:[%s7] sm:$0x1]
    %v78 = vld [vmem:[%s8] sm:$0x1]
    %v79 = vlaneseq
    %v80 = vand.u32 %v79, 127
    %vm81 = vcmp.lt.s32.totalorder %v80, 32
    %v82 = vsel %vm81, 1, 0
    %v83 = vcvt.s32.f32 %v82
    %v84 = vld [vmem:[#allocation5] sm:$0xff]
    %v85 = vld [vmem:[#allocation5 + $0x8] sm:$0xff]
    %v86 = vld [vmem:[#allocation5 + $0x10] sm:$0xff]
    %v87 = vld [vmem:[#allocation5 + $0x18] sm:$0xff]
    %v88 = vld [vmem:[#allocation5 + $0x20] sm:$0xff]
    %v89 = vld [vmem:[#allocation5 + $0x28] sm:$0xff]
    %v90 = vld [vmem:[#allocation5 + $0x30] sm:$0xff]
    %v91 = vld [vmem:[#allocation5 + $0x38] sm:$0xff]
    %v92 = vld [vmem:[#allocation5 + $0x40] sm:$0xff]
    %v93 = vld [vmem:[#allocation5 + $0x48] sm:$0xff]
    %v94 = vld [vmem:[#allocation5 + $0x50] sm:$0xff]
    %v95 = vld [vmem:[#allocation5 + $0x58] sm:$0xff]
    %v96 = vld [vmem:[#allocation5 + $0x60] sm:$0xff]
    %v97 = vld [vmem:[#allocation5 + $0x68] sm:$0xff]
    %v98 = vld [vmem:[#allocation5 + $0x70] sm:$0xff]
    %v99 = vld [vmem:[#allocation5 + $0x78] sm:$0xff]
    %v101 = vlaneseq
    %v102 = vshrl.u32 %v101, 7
    %v103 = vsub.s32 0, %v102
    %v104 = vrot.slane %v73, %v103
    %106 = vmatprep.subr.mxu0 0.0
    %107 = vmatpush1.msra.mxu0 %v84
    %108 = vmatprep.subr.mxu0 0.0
    %109 = vmatpush1.msra.mxu0 %v85
    %110 = vmatprep.subr.mxu0 0.0
    %111 = vmatpush1.msra.mxu0 %v86
    %112 = vmatprep.subr.mxu0 0.0
    %113 = vmatpush1.msra.mxu0 %v87
    %114 = vmatprep.subr.mxu0 0.0
    %115 = vmatpush1.msra.mxu0 %v88
    %116 = vmatprep.subr.mxu0 0.0
    %117 = vmatpush1.msra.mxu0 %v89
    %118 = vmatprep.subr.mxu0 0.0
    %119 = vmatpush1.msra.mxu0 %v90
    %120 = vmatprep.subr.mxu0 0.0
    %121 = vmatpush1.msra.mxu0 %v91
    %122 = vmatprep.subr.mxu0 0.0
    %123 = vmatpush1.msra.mxu0 %v92
    %124 = vmatprep.subr.mxu0 0.0
    %125 = vmatpush1.msra.mxu0 %v93
    %126 = vmatprep.subr.mxu0 0.0
    %127 = vmatpush1.msra.mxu0 %v94
    %128 = vmatprep.subr.mxu0 0.0
    %129 = vmatpush1.msra.mxu0 %v95
    %130 = vmatprep.subr.mxu0 0.0
    %131 = vmatpush1.msra.mxu0 %v96
    %132 = vmatprep.subr.mxu0 0.0
    %133 = vmatpush1.msra.mxu0 %v97
    %134 = vmatprep.subr.mxu0 0.0
    %135 = vmatpush1.msra.mxu0 %v98
    %136 = vmatprep.subr.mxu0 0.0
    %137 = vmatpush1.msra.mxu0 %v99
    %138 = vmatprep.subr.mxu0 0.0
    %139 = vmatpush1.msra.mxu0 0.0
    %140 = vmatprep.subr.mxu0 0.0
    %141 = vmatpush1.msra.mxu0 0.0
    %142 = vmatprep.subr.mxu0 0.0
    %143 = vmatpush1.msra.mxu0 0.0
    %144 = vmatprep.subr.mxu0 0.0
    %145 = vmatpush1.msra.mxu0 0.0
    %146 = vmatprep.subr.mxu0 0.0
    %147 = vmatpush1.msra.mxu0 0.0
    %148 = vmatprep.subr.mxu0 0.0
    %149 = vmatpush1.msra.mxu0 0.0
    %150 = vmatprep.subr.mxu0 0.0
    %151 = vmatpush1.msra.mxu0 0.0
    %152 = vmatprep.subr.mxu0 0.0
    %153 = vmatpush1.msra.mxu0 0.0
    %154 = vmatprep.subr.mxu0 0.0
    %155 = vmatpush1.msra.mxu0 0.0
    %156 = vmatprep.subr.mxu0 0.0
    %157 = vmatpush1.msra.mxu0 0.0
    %158 = vmatprep.subr.mxu0 0.0
    %159 = vmatpush1.msra.mxu0 0.0
    %160 = vmatprep.subr.mxu0 0.0
    %161 = vmatpush1.msra.mxu0 0.0
    %162 = vmatprep.subr.mxu0 0.0
    %163 = vmatpush1.msra.mxu0 0.0
    %164 = vmatprep.subr.mxu0 0.0
    %165 = vmatpush1.msra.mxu0 0.0
    %166 = vmatprep.subr.mxu0 0.0
    %167 = vmatpush1.msra.mxu0 0.0
    %168 = vmatprep.subr.mxu0 0.0
    %169 = vmatpush1.msra.mxu0 0.0
    %170 = vmatprep.mubr.f32.mxu0 0.0
    %171 = vmatmul.mubr.f32.gmra.mrb[0].mxu0 %v72
    %v172 = vpop.f32.mrb[0].mxu0
    %v173 = vadd.f32 %v104, %v172
    %v174 = vpop.f32.mrb[0].mxu0
    %175 = vdwg.mxu0
    %176 = vadd.xlane.f32.xlu0 %v173
    %v177 = vpop.xlane.xlu0 %176
    %v178 = vmul.f32 %v177, 0.03125
    %v179 = vsub.f32 %v173, %v178
    %v180 = vmul.f32 %v179, %v83
    %v181 = vmul.f32 %v180, %v180
    %182 = vadd.xlane.f32.xlu0 %v181
    %v183 = vpop.xlane.xlu0 %182
    %v184 = vmul.f32 %v183, 0.03125
    %v185 = vadd.f32 %v184, 1e-05
    %v186 = vrsqrt.pop %v185
    %v187 = vmul.f32 %v179, %v186
    %v189 = vlaneseq
    %v190 = vshrl.u32 %v189, 7
    %v191 = vsub.s32 0, %v190
    %v192 = vrot.slane %v74, %v191
    %v194 = vmul.f32 %v187, %v192
    %v196 = vlaneseq
    %v197 = vshrl.u32 %v196, 7
    %v198 = vsub.s32 0, %v197
    %v199 = vrot.slane %v75, %v198
    %v201 = vadd.f32 %v194, %v199
    %v202 = vmax.f32 %v201, 0.0
    %v203 = vld [vmem:[#allocation7] sm:$0xff]
    %v204 = vld [vmem:[#allocation7 + $0x8] sm:$0xff]
    %v205 = vld [vmem:[#allocation7 + $0x10] sm:$0xff]
    %v206 = vld [vmem:[#allocation7 + $0x18] sm:$0xff]
    %v207 = vld [vmem:[#allocation7 + $0x20] sm:$0xff]
    %v208 = vld [vmem:[#allocation7 + $0x28] sm:$0xff]
    %v209 = vld [vmem:[#allocation7 + $0x30] sm:$0xff]
    %v210 = vld [vmem:[#allocation7 + $0x38] sm:$0xff]
    %v211 = vld [vmem:[#allocation7 + $0x40] sm:$0xff]
    %v212 = vld [vmem:[#allocation7 + $0x48] sm:$0xff]
    %v213 = vld [vmem:[#allocation7 + $0x50] sm:$0xff]
    %v214 = vld [vmem:[#allocation7 + $0x58] sm:$0xff]
    %v215 = vld [vmem:[#allocation7 + $0x60] sm:$0xff]
    %v216 = vld [vmem:[#allocation7 + $0x68] sm:$0xff]
    %v217 = vld [vmem:[#allocation7 + $0x70] sm:$0xff]
    %v218 = vld [vmem:[#allocation7 + $0x78] sm:$0xff]
    %v220 = vlaneseq
    %v221 = vshrl.u32 %v220, 7
    %v222 = vsub.s32 0, %v221
    %v223 = vrot.slane %v76, %v222
    %225 = vmatprep.subr.mxu0 0.0
    %226 = vmatpush1.msra.mxu0 %v203
    %227 = vmatprep.subr.mxu0 0.0
    %228 = vmatpush1.msra.mxu0 %v204
    %229 = vmatprep.subr.mxu0 0.0
    %230 = vmatpush1.msra.mxu0 %v205
    %231 = vmatprep.subr.mxu0 0.0
    %232 = vmatpush1.msra.mxu0 %v206
    %233 = vmatprep.subr.mxu0 0.0
    %234 = vmatpush1.msra.mxu0 %v207
    %235 = vmatprep.subr.mxu0 0.0
    %236 = vmatpush1.msra.mxu0 %v208
    %237 = vmatprep.subr.mxu0 0.0
    %238 = vmatpush1.msra.mxu0 %v209
    %239 = vmatprep.subr.mxu0 0.0
    %240 = vmatpush1.msra.mxu0 %v210
    %241 = vmatprep.subr.mxu0 0.0
    %242 = vmatpush1.msra.mxu0 %v211
    %243 = vmatprep.subr.mxu0 0.0
    %244 = vmatpush1.msra.mxu0 %v212
    %245 = vmatprep.subr.mxu0 0.0
    %246 = vmatpush1.msra.mxu0 %v213
    %247 = vmatprep.subr.mxu0 0.0
    %248 = vmatpush1.msra.mxu0 %v214
    %249 = vmatprep.subr.mxu0 0.0
    %250 = vmatpush1.msra.mxu0 %v215
    %251 = vmatprep.subr.mxu0 0.0
    %252 = vmatpush1.msra.mxu0 %v216
    %253 = vmatprep.subr.mxu0 0.0
    %254 = vmatpush1.msra.mxu0 %v217
    %255 = vmatprep.subr.mxu0 0.0
    %256 = vmatpush1.msra.mxu0 %v218
    %257 = vmatprep.subr.mxu0 0.0
    %258 = vmatpush1.msra.mxu0 0.0
    %259 = vmatprep.subr.mxu0 0.0
    %260 = vmatpush1.msra.mxu0 0.0
    %261 = vmatprep.subr.mxu0 0.0
    %262 = vmatpush1.msra.mxu0 0.0
    %263 = vmatprep.subr.mxu0 0.0
    %264 = vmatpush1.msra.mxu0 0.0
    %265 = vmatprep.subr.mxu0 0.0
    %266 = vmatpush1.msra.mxu0 0.0
    %267 = vmatprep.subr.mxu0 0.0
    %268 = vmatpush1.msra.mxu0 0.0
    %269 = vmatprep.subr.mxu0 0.0
    %270 = vmatpush1.msra.mxu0 0.0
    %271 = vmatprep.subr.mxu0 0.0
    %272 = vmatpush1.msra.mxu0 0.0
    %273 = vmatprep.subr.mxu0 0.0
    %274 = vmatpush1.msra.mxu0 0.0
    %275 = vmatprep.subr.mxu0 0.0
    %276 = vmatpush1.msra.mxu0 0.0
    %277 = vmatprep.subr.mxu0 0.0
    %278 = vmatpush1.msra.mxu0 0.0
    %279 = vmatprep.subr.mxu0 0.0
    %280 = vmatpush1.msra.mxu0 0.0
    %281 = vmatprep.subr.mxu0 0.0
    %282 = vmatpush1.msra.mxu0 0.0
    %283 = vmatprep.subr.mxu0 0.0
    %284 = vmatpush1.msra.mxu0 0.0
    %285 = vmatprep.subr.mxu0 0.0
    %286 = vmatpush1.msra.mxu0 0.0
    %287 = vmatprep.subr.mxu0 0.0
    %288 = vmatpush1.msra.mxu0 0.0
    %289 = vmatprep.mubr.f32.mxu0 0.0
    %290 = vmatmul.mubr.f32.gmra.mrb[0].mxu0 %v202
    %v291 = vpop.f32.mrb[0].mxu0
    %v292 = vadd.f32 %v223, %v291
    %v293 = vpop.f32.mrb[0].mxu0
    %294 = vdwg.mxu0
    %295 = vadd.xlane.f32.xlu0 %v292
    %v296 = vpop.xlane.xlu0 %295
    %v297 = vmul.f32 %v296, 0.03125
    %v298 = vsub.f32 %v292, %v297
    %v299 = vmul.f32 %v298, %v83
    %v300 = vmul.f32 %v299, %v299
    %301 = vadd.xlane.f32.xlu0 %v300
    %v302 = vpop.xlane.xlu0 %301
    %v303 = vmul.f32 %v302, 0.03125
    %v304 = vadd.f32 %v303, 1e-05
    %v305 = vrsqrt.pop %v304
    %v306 = vmul.f32 %v298, %v305
    %v308 = vlaneseq
    %v309 = vshrl.u32 %v308, 7
    %v310 = vsub.s32 0, %v309
    %v311 = vrot.slane %v77, %v310
    %v313 = vmul.f32 %v306, %v311
    %v315 = vlaneseq
    %v316 = vshrl.u32 %v315, 7
    %v317 = vsub.s32 0, %v316
    %v318 = vrot.slane %v78, %v317
    %v320 = vadd.f32 %v313, %v318
    %v321 = vmax.f32 %v320, 0.0
    %v322 = vadd.f32 %v321, %v72
    %323 = vst [vmem:[#allocation8] sm:$0xff] %v322
    // Predicated region
    $region50: #{tpu_custom_call.1} parent=1 // pred_check
      _
    $region51: #{tpu_custom_call.1} parent=1 // pred_check_branch
      %325 = sbr.rel (0) target = $region53
    $region52: #{tpu_custom_call.1} parent=1 // pred_region
      %s327 = ssub.s32 128, 128
      %328 = vsyncadd [#allocation4], %s327
      %s330 = sshll.u32 [#allocation8], 4
      %s331 = int_to_ptr.vmem [resolvable:$true] %s330
      %333 = dma.vmem_to_hbm [thread:$0]  %s331, 128, %s9, [#allocation4]
    $region53: #{tpu_custom_call.1} parent=1 // pred_fallthru
      _
    // Predicated region
    $region54: #{tpu_custom_call.1} parent=1 // pred_check
      _
    $region55: #{tpu_custom_call.1} parent=1 // pred_check_branch
      %335 = sbr.rel (0) target = $region57
    $region56: #{tpu_custom_call.1} parent=1 // pred_region
      %336 = dma.done [#allocation4], 128
    $region57: #{tpu_custom_call.1} parent=1 // pred_fallthru
      _
    %337 = vsyncpa [#allocation3], 1
    %338 = vsyncpa [#allocation6], 1
    %339 = vsyncpa [#allocation4], 1

// kernel: tpu_custom_call.1
$region0: #{tpu_custom_call.1}
  #allocation0 [shape = 'u32[]', space=smem, size = 0x4, offset = 0x4, fixed_abs, tag = 'smem constant byte address 0x4 - core index']
  #allocation1 [shape = 'u32[144,128]{1,0:T(1,128)}', space=vmem, size = 0x12000, scoped, tag = 'internal scratch']
  %s0 = inlined_call_operand.hbm [shape: f32[8,128], index: 0, kind: input, shape index: {}]
  %s1 = inlined_call_operand.hbm [shape: f32[128,128], index: 1, kind: input, shape index: {}]
  %s2 = inlined_call_operand.vmem [shape: f32[1,128], index: 2, kind: input, shape index: {}]
  %s3 = inlined_call_operand.vmem [shape: f32[1,128], index: 3, kind: input, shape index: {}]
  %s4 = inlined_call_operand.vmem [shape: f32[1,128], index: 4, kind: input, shape index: {}]
  %s5 = inlined_call_operand.hbm [shape: f32[128,128], index: 5, kind: input, shape index: {}]
  %s6 = inlined_call_operand.vmem [shape: f32[1,128], index: 6, kind: input, shape index: {}]
  %s7 = inlined_call_operand.vmem [shape: f32[1,128], index: 7, kind: input, shape index: {}]
  %s8 = inlined_call_operand.vmem [shape: f32[1,128], index: 8, kind: input, shape index: {}]
  %s9 = inlined_call_operand.hbm [shape: f32[8,128], index: 9, kind: output, shape index: {}]
  %s10 = sld [smem:[#allocation0]]
  $region58: #{tpu_custom_call.1} parent=0
    _
  %s12 = ssub.s32 1, %s10
  %s13 = scalar_select 0, %s12, %s10
  $region1: #{tpu_custom_call.1} parent=0
    #allocation2 [shape = 'u8[4096]{0}', space=vmem, size = 0x1000, scoped, tag = 'input window, operand 0, single buffered']
    #allocation3 [shape = 's32[1]{0}', space=sflag, size = 0x4, scoped, tag = 'scoped memory for tpu_custom_call.1']
    #allocation4 [shape = 's32[1]{0}', space=sflag, size = 0x4, scoped, tag = 'scoped memory for tpu_custom_call.1']
    #allocation5 [shape = 'u8[65536]{0}', space=vmem, size = 0x10000, scoped, tag = 'input window, operand 1, single buffered']
    #allocation6 [shape = 's32[1]{0}', space=sflag, size = 0x4, scoped, tag = 'scoped memory for tpu_custom_call.1']
    #allocation7 [shape = 'u8[65536]{0}', space=vmem, size = 0x10000, scoped, tag = 'input window, operand 5, single buffered']
    #allocation8 [shape = 'u8[4096]{0}', space=vmem, size = 0x1000, scoped, tag = 'output window, operand 0, single buffered']
    %14 = vsyncpa [#allocation3], 0
    %15 = vsyncpa [#allocation6], 0
    %16 = vsyncpa [#allocation4], 0
    // Predicated region
    $region2: #{tpu_custom_call.1} parent=1 // pred_check
      _
    $region3: #{tpu_custom_call.1} parent=1 // pred_check_branch
      %18 = sbr.rel (0) target = $region5
    $region4: #{tpu_custom_call.1} parent=1 // pred_region
      %s20 = ssub.s32 128, 128
      %21 = vsyncadd [#allocation3], %s20
      %s23 = sshll.u32 [#allocation2], 4
      %s24 = int_to_ptr.vmem [resolvable:$true] %s23
      %26 = dma.hbm_to_vmem [thread:$0]  %s0, 128, %s24, [#allocation3]
    $region5: #{tpu_custom_call.1} parent=1 // pred_fallthru
      _
    // Predicated region
    $region6: #{tpu_custom_call.1} parent=1 // pred_check
      _
    $region7: #{tpu_custom_call.1} parent=1 // pred_check_branch
      %28 = sbr.rel (0) target = $region9
    $region8: #{tpu_custom_call.1} parent=1 // pred_region
      %s30 = ssub.s32 2048, 2048
      %31 = vsyncadd [#allocation6], %s30
      %s32 = sshll.u32 [#allocation5], 4
      %s33 = int_to_ptr.vmem [resolvable:$true] %s32
      %38 = dma.hbm_to_vmem [thread:$0]  %s1, 2048, %s33, [#allocation6], 128, 128, 8
    $region9: #{tpu_custom_call.1} parent=1 // pred_fallthru
      _
    // Predicated region
    $region10: #{tpu_custom_call.1} parent=1 // pred_check
      _
    $region11: #{tpu_custom_call.1} parent=1 // pred_check_branch
      %40 = sbr.rel (0) target = $region13
    $region12: #{tpu_custom_call.1} parent=1 // pred_region
      _
    $region13: #{tpu_custom_call.1} parent=1 // pred_fallthru
      _
    // Predicated region
    $region14: #{tpu_custom_call.1} parent=1 // pred_check
      _
    $region15: #{tpu_custom_call.1} parent=1 // pred_check_branch
      %42 = sbr.rel (0) target = $region17
    $region16: #{tpu_custom_call.1} parent=1 // pred_region
      _
    $region17: #{tpu_custom_call.1} parent=1 // pred_fallthru
      _
    // Predicated region
    $region18: #{tpu_custom_call.1} parent=1 // pred_check
      _
    $region19: #{tpu_custom_call.1} parent=1 // pred_check_branch
      %44 = sbr.rel (0) target = $region21
    $region20: #{tpu_custom_call.1} parent=1 // pred_region
      _
    $region21: #{tpu_custom_call.1} parent=1 // pred_fallthru
      _
    // Predicated region
    $region22: #{tpu_custom_call.1} parent=1 // pred_check
      _
    $region23: #{tpu_custom_call.1} parent=1 // pred_check_branch
      %46 = sbr.rel (0) target = $region25
    $region24: #{tpu_custom_call.1} parent=1 // pred_region
      %s48 = ssub.s32 2048, 2048
      %49 = vsyncadd [#allocation6], %s48
      %s50 = sshll.u32 [#allocation7], 4
      %s51 = int_to_ptr.vmem [resolvable:$true] %s50
      %56 = dma.hbm_to_vmem [thread:$0]  %s5, 2048, %s51, [#allocation6], 128, 128, 8
    $region25: #{tpu_custom_call.1} parent=1 // pred_fallthru
      _
    // Predicated region
    $region26: #{tpu_custom_call.1} parent=1 // pred_check
      _
    $region27: #{tpu_custom_call.1} parent=1 // pred_check_branch
      %58 = sbr.rel (0) target = $region29
    $region28: #{tpu_custom_call.1} parent=1 // pred_region
      _
    $region29: #{tpu_custom_call.1} parent=1 // pred_fallthru
      _
    // Predicated region
    $region30: #{tpu_custom_call.1} parent=1 // pred_check
      _
    $region31: #{tpu_custom_call.1} parent=1 // pred_check_branch
      %60 = sbr.rel (0) target = $region33
    $region32: #{tpu_custom_call.1} parent=1 // pred_region
      _
    $region33: #{tpu_custom_call.1} parent=1 // pred_fallthru
      _
    // Predicated region
    $region34: #{tpu_custom_call.1} parent=1 // pred_check
      _
    $region35: #{tpu_custom_call.1} parent=1 // pred_check_branch
      %62 = sbr.rel (0) target = $region37
    $region36: #{tpu_custom_call.1} parent=1 // pred_region
      _
    $region37: #{tpu_custom_call.1} parent=1 // pred_fallthru
      _
    // Predicated region
    $region38: #{tpu_custom_call.1} parent=1 // pred_check
      _
    $region39: #{tpu_custom_call.1} parent=1 // pred_check_branch
      %64 = sbr.rel (0) target = $region41
    $region40: #{tpu_custom_call.1} parent=1 // pred_region
      %65 = dma.done [#allocation3], 128
    $region41: #{tpu_custom_call.1} parent=1 // pred_fallthru
      _
    // Predicated region
    $region42: #{tpu_custom_call.1} parent=1 // pred_check
      _
    $region43: #{tpu_custom_call.1} parent=1 // pred_check_branch
      %67 = sbr.rel (0) target = $region45
    $region44: #{tpu_custom_call.1} parent=1 // pred_region
      %68 = dma.done [#allocation6], 2048
    $region45: #{tpu_custom_call.1} parent=1 // pred_fallthru
      _
    // Predicated region
    $region46: #{tpu_custom_call.1} parent=1 // pred_check
      _
    $region47: #{tpu_custom_call.1} parent=1 // pred_check_branch
      %70 = sbr.rel (0) target = $region49
    $region48: #{tpu_custom_call.1} parent=1 // pred_region
      %71 = dma.done [#allocation6], 2048
    $region49: #{tpu_custom_call.1} parent=1 // pred_fallthru
      _
    %v72 = vld [vmem:[#allocation2] sm:$0xff]
    %v73 = vld [vmem:[%s2] sm:$0x1]
    %v74 = vld [vmem:[%s3] sm:$0x1]
    %v75 = vld [vmem:[%s4] sm:$0x1]
    %v76 = vld [vmem:[%s6] sm:$0x1]
    %v77 = vld [vmem:[%s7] sm:$0x1]
    %v78 = vld [vmem:[%s8] sm:$0x1]
    %v79 = vlaneseq
    %v80 = vand.u32 %v79, 127
    %vm81 = vcmp.lt.s32.totalorder %v80, 32
    %v82 = vsel %vm81, 1, 0
    %v83 = vcvt.s32.f32 %v82
    %v84 = vld [vmem:[#allocation5] sm:$0xff]
    %v85 = vld [vmem:[#allocation5 + $0x8] sm:$0xff]
    %v86 = vld [vmem:[#allocation5 + $0x10] sm:$0xff]
    %v87 = vld [vmem:[#allocation5 + $0x18] sm:$0xff]
    %v88 = vld [vmem:[#allocation5 + $0x20] sm:$0xff]
    %v89 = vld [vmem:[#allocation5 + $0x28] sm:$0xff]
    %v90 = vld [vmem:[#allocation5 + $0x30] sm:$0xff]
    %v91 = vld [vmem:[#allocation5 + $0x38] sm:$0xff]
    %v92 = vld [vmem:[#allocation5 + $0x40] sm:$0xff]
    %v93 = vld [vmem:[#allocation5 + $0x48] sm:$0xff]
    %v94 = vld [vmem:[#allocation5 + $0x50] sm:$0xff]
    %v95 = vld [vmem:[#allocation5 + $0x58] sm:$0xff]
    %v96 = vld [vmem:[#allocation5 + $0x60] sm:$0xff]
    %v97 = vld [vmem:[#allocation5 + $0x68] sm:$0xff]
    %v98 = vld [vmem:[#allocation5 + $0x70] sm:$0xff]
    %v99 = vld [vmem:[#allocation5 + $0x78] sm:$0xff]
    %v101 = vlaneseq
    %v102 = vshrl.u32 %v101, 7
    %v103 = vsub.s32 0, %v102
    %v104 = vrot.slane %v73, %v103
    %106 = vmatprep.subr.mxu0 0.0
    %107 = vmatpush1.msra.mxu0 %v84
    %108 = vmatprep.subr.mxu0 0.0
    %109 = vmatpush1.msra.mxu0 %v85
    %110 = vmatprep.subr.mxu0 0.0
    %111 = vmatpush1.msra.mxu0 %v86
    %112 = vmatprep.subr.mxu0 0.0
    %113 = vmatpush1.msra.mxu0 %v87
    %114 = vmatprep.subr.mxu0 0.0
    %115 = vmatpush1.msra.mxu0 %v88
    %116 = vmatprep.subr.mxu0 0.0
    %117 = vmatpush1.msra.mxu0 %v89
    %118 = vmatprep.subr.mxu0 0.0
    %119 = vmatpush1.msra.mxu0 %v90
    %120 = vmatprep.subr.mxu0 0.0
    %121 = vmatpush1.msra.mxu0 %v91
    %122 = vmatprep.subr.mxu0 0.0
    %123 = vmatpush1.msra.mxu0 %v92
    %124 = vmatprep.subr.mxu0 0.0
    %125 = vmatpush1.msra.mxu0 %v93
    %126 = vmatprep.subr.mxu0 0.0
    %127 = vmatpush1.msra.mxu0 %v94
    %128 = vmatprep.subr.mxu0 0.0
    %129 = vmatpush1.msra.mxu0 %v95
    %130 = vmatprep.subr.mxu0 0.0
    %131 = vmatpush1.msra.mxu0 %v96
    %132 = vmatprep.subr.mxu0 0.0
    %133 = vmatpush1.msra.mxu0 %v97
    %134 = vmatprep.subr.mxu0 0.0
    %135 = vmatpush1.msra.mxu0 %v98
    %136 = vmatprep.subr.mxu0 0.0
    %137 = vmatpush1.msra.mxu0 %v99
    %138 = vmatprep.subr.mxu0 0.0
    %139 = vmatpush1.msra.mxu0 0.0
    %140 = vmatprep.subr.mxu0 0.0
    %141 = vmatpush1.msra.mxu0 0.0
    %142 = vmatprep.subr.mxu0 0.0
    %143 = vmatpush1.msra.mxu0 0.0
    %144 = vmatprep.subr.mxu0 0.0
    %145 = vmatpush1.msra.mxu0 0.0
    %146 = vmatprep.subr.mxu0 0.0
    %147 = vmatpush1.msra.mxu0 0.0
    %148 = vmatprep.subr.mxu0 0.0
    %149 = vmatpush1.msra.mxu0 0.0
    %150 = vmatprep.subr.mxu0 0.0
    %151 = vmatpush1.msra.mxu0 0.0
    %152 = vmatprep.subr.mxu0 0.0
    %153 = vmatpush1.msra.mxu0 0.0
    %154 = vmatprep.subr.mxu0 0.0
    %155 = vmatpush1.msra.mxu0 0.0
    %156 = vmatprep.subr.mxu0 0.0
    %157 = vmatpush1.msra.mxu0 0.0
    %158 = vmatprep.subr.mxu0 0.0
    %159 = vmatpush1.msra.mxu0 0.0
    %160 = vmatprep.subr.mxu0 0.0
    %161 = vmatpush1.msra.mxu0 0.0
    %162 = vmatprep.subr.mxu0 0.0
    %163 = vmatpush1.msra.mxu0 0.0
    %164 = vmatprep.subr.mxu0 0.0
    %165 = vmatpush1.msra.mxu0 0.0
    %166 = vmatprep.subr.mxu0 0.0
    %167 = vmatpush1.msra.mxu0 0.0
    %168 = vmatprep.subr.mxu0 0.0
    %169 = vmatpush1.msra.mxu0 0.0
    %170 = vmatprep.mubr.f32.mxu0 0.0
    %171 = vmatmul.mubr.f32.gmra.mrb[0].mxu0 %v72
    %v172 = vpop.f32.mrb[0].mxu0
    %v173 = vadd.f32 %v104, %v172
    %v174 = vpop.f32.mrb[0].mxu0
    %175 = vdwg.mxu0
    %176 = vadd.xlane.f32.xlu0 %v173
    %v177 = vpop.xlane.xlu0 %176
    %v178 = vmul.f32 %v177, 0.03125
    %v179 = vsub.f32 %v173, %v178
    %v180 = vmul.f32 %v179, %v83
    %v181 = vmul.f32 %v180, %v180
    %182 = vadd.xlane.f32.xlu0 %v181
    %v183 = vpop.xlane.xlu0 %182
    %v184 = vmul.f32 %v183, 0.03125
    %v185 = vadd.f32 %v184, 1e-05
    %v186 = vrsqrt.pop %v185
    %v187 = vmul.f32 %v179, %v186
    %v189 = vlaneseq
    %v190 = vshrl.u32 %v189, 7
    %v191 = vsub.s32 0, %v190
    %v192 = vrot.slane %v74, %v191
    %v194 = vmul.f32 %v187, %v192
    %v196 = vlaneseq
    %v197 = vshrl.u32 %v196, 7
    %v198 = vsub.s32 0, %v197
    %v199 = vrot.slane %v75, %v198
    %v201 = vadd.f32 %v194, %v199
    %v202 = vmax.f32 %v201, 0.0
    %v203 = vld [vmem:[#allocation7] sm:$0xff]
    %v204 = vld [vmem:[#allocation7 + $0x8] sm:$0xff]
    %v205 = vld [vmem:[#allocation7 + $0x10] sm:$0xff]
    %v206 = vld [vmem:[#allocation7 + $0x18] sm:$0xff]
    %v207 = vld [vmem:[#allocation7 + $0x20] sm:$0xff]
    %v208 = vld [vmem:[#allocation7 + $0x28] sm:$0xff]
    %v209 = vld [vmem:[#allocation7 + $0x30] sm:$0xff]
    %v210 = vld [vmem:[#allocation7 + $0x38] sm:$0xff]
    %v211 = vld [vmem:[#allocation7 + $0x40] sm:$0xff]
    %v212 = vld [vmem:[#allocation7 + $0x48] sm:$0xff]
    %v213 = vld [vmem:[#allocation7 + $0x50] sm:$0xff]
    %v214 = vld [vmem:[#allocation7 + $0x58] sm:$0xff]
    %v215 = vld [vmem:[#allocation7 + $0x60] sm:$0xff]
    %v216 = vld [vmem:[#allocation7 + $0x68] sm:$0xff]
    %v217 = vld [vmem:[#allocation7 + $0x70] sm:$0xff]
    %v218 = vld [vmem:[#allocation7 + $0x78] sm:$0xff]
    %v220 = vlaneseq
    %v221 = vshrl.u32 %v220, 7
    %v222 = vsub.s32 0, %v221
    %v223 = vrot.slane %v76, %v222
    %225 = vmatprep.subr.mxu0 0.0
    %226 = vmatpush1.msra.mxu0 %v203
    %227 = vmatprep.subr.mxu0 0.0
    %228 = vmatpush1.msra.mxu0 %v204
    %229 = vmatprep.subr.mxu0 0.0
    %230 = vmatpush1.msra.mxu0 %v205
    %231 = vmatprep.subr.mxu0 0.0
    %232 = vmatpush1.msra.mxu0 %v206
    %233 = vmatprep.subr.mxu0 0.0
    %234 = vmatpush1.msra.mxu0 %v207
    %235 = vmatprep.subr.mxu0 0.0
    %236 = vmatpush1.msra.mxu0 %v208
    %237 = vmatprep.subr.mxu0 0.0
    %238 = vmatpush1.msra.mxu0 %v209
    %239 = vmatprep.subr.mxu0 0.0
    %240 = vmatpush1.msra.mxu0 %v210
    %241 = vmatprep.subr.mxu0 0.0
    %242 = vmatpush1.msra.mxu0 %v211
    %243 = vmatprep.subr.mxu0 0.0
    %244 = vmatpush1.msra.mxu0 %v212
    %245 = vmatprep.subr.mxu0 0.0
    %246 = vmatpush1.msra.mxu0 %v213
    %247 = vmatprep.subr.mxu0 0.0
    %248 = vmatpush1.msra.mxu0 %v214
    %249 = vmatprep.subr.mxu0 0.0
    %250 = vmatpush1.msra.mxu0 %v215
    %251 = vmatprep.subr.mxu0 0.0
    %252 = vmatpush1.msra.mxu0 %v216
    %253 = vmatprep.subr.mxu0 0.0
    %254 = vmatpush1.msra.mxu0 %v217
    %255 = vmatprep.subr.mxu0 0.0
    %256 = vmatpush1.msra.mxu0 %v218
    %257 = vmatprep.subr.mxu0 0.0
    %258 = vmatpush1.msra.mxu0 0.0
    %259 = vmatprep.subr.mxu0 0.0
    %260 = vmatpush1.msra.mxu0 0.0
    %261 = vmatprep.subr.mxu0 0.0
    %262 = vmatpush1.msra.mxu0 0.0
    %263 = vmatprep.subr.mxu0 0.0
    %264 = vmatpush1.msra.mxu0 0.0
    %265 = vmatprep.subr.mxu0 0.0
    %266 = vmatpush1.msra.mxu0 0.0
    %267 = vmatprep.subr.mxu0 0.0
    %268 = vmatpush1.msra.mxu0 0.0
    %269 = vmatprep.subr.mxu0 0.0
    %270 = vmatpush1.msra.mxu0 0.0
    %271 = vmatprep.subr.mxu0 0.0
    %272 = vmatpush1.msra.mxu0 0.0
    %273 = vmatprep.subr.mxu0 0.0
    %274 = vmatpush1.msra.mxu0 0.0
    %275 = vmatprep.subr.mxu0 0.0
    %276 = vmatpush1.msra.mxu0 0.0
    %277 = vmatprep.subr.mxu0 0.0
    %278 = vmatpush1.msra.mxu0 0.0
    %279 = vmatprep.subr.mxu0 0.0
    %280 = vmatpush1.msra.mxu0 0.0
    %281 = vmatprep.subr.mxu0 0.0
    %282 = vmatpush1.msra.mxu0 0.0
    %283 = vmatprep.subr.mxu0 0.0
    %284 = vmatpush1.msra.mxu0 0.0
    %285 = vmatprep.subr.mxu0 0.0
    %286 = vmatpush1.msra.mxu0 0.0
    %287 = vmatprep.subr.mxu0 0.0
    %288 = vmatpush1.msra.mxu0 0.0
    %289 = vmatprep.mubr.f32.mxu0 0.0
    %290 = vmatmul.mubr.f32.gmra.mrb[0].mxu0 %v202
    %v291 = vpop.f32.mrb[0].mxu0
    %v292 = vadd.f32 %v223, %v291
    %v293 = vpop.f32.mrb[0].mxu0
    %294 = vdwg.mxu0
    %295 = vadd.xlane.f32.xlu0 %v292
    %v296 = vpop.xlane.xlu0 %295
    %v297 = vmul.f32 %v296, 0.03125
    %v298 = vsub.f32 %v292, %v297
    %v299 = vmul.f32 %v298, %v83
    %v300 = vmul.f32 %v299, %v299
    %301 = vadd.xlane.f32.xlu0 %v300
    %v302 = vpop.xlane.xlu0 %301
    %v303 = vmul.f32 %v302, 0.03125
    %v304 = vadd.f32 %v303, 1e-05
    %v305 = vrsqrt.pop %v304
    %v306 = vmul.f32 %v298, %v305
    %v308 = vlaneseq
    %v309 = vshrl.u32 %v308, 7
    %v310 = vsub.s32 0, %v309
    %v311 = vrot.slane %v77, %v310
    %v313 = vmul.f32 %v306, %v311
    %v315 = vlaneseq
    %v316 = vshrl.u32 %v315, 7
    %v317 = vsub.s32 0, %v316
    %v318 = vrot.slane %v78, %v317
    %v320 = vadd.f32 %v313, %v318
    %v321 = vmax.f32 %v320, 0.0
    %v322 = vadd.f32 %v321, %v72
    %323 = vst [vmem:[#allocation8] sm:$0xff] %v322
    // Predicated region
    $region50: #{tpu_custom_call.1} parent=1 // pred_check
      _
    $region51: #{tpu_custom_call.1} parent=1 // pred_check_branch
      %325 = sbr.rel (0) target = $region53
    $region52: #{tpu_custom_call.1} parent=1 // pred_region
      %s327 = ssub.s32 128, 128
      %328 = vsyncadd [#allocation4], %s327
      %s330 = sshll.u32 [#allocation8], 4
      %s331 = int_to_ptr.vmem [resolvable:$true] %s330
      %333 = dma.vmem_to_hbm [thread:$0]  %s331, 128, %s9, [#allocation4]
    $region53: #{tpu_custom_call.1} parent=1 // pred_fallthru
      _
    // Predicated region
    $region54: #{tpu_custom_call.1} parent=1 // pred_check
      _
    $region55: #{tpu_custom_call.1} parent=1 // pred_check_branch
      %335 = sbr.rel (0) target = $region57
    $region56: #{tpu_custom_call.1} parent=1 // pred_region
      %336 = dma.done [#allocation4], 128
    $region57: #{tpu_custom_call.1} parent=1 // pred_fallthru
      _
    %337 = vsyncpa [#allocation3], 1
    %338 = vsyncpa [#allocation6], 1
    %339 = vsyncpa [#allocation4], 1

</llo_original>
